<compile_context>
chip_gen: v5e
topology: v5e:2x2
jax: 0.10.0
libtpu: 0.0.40
codegen_flags: <defaults>
</compile_context>

<pallas_src>
import jax
import jax.numpy as jnp
from jax import lax
from jax.experimental import pallas as pl
from jax.experimental.pallas import tpu as pltpu

DROPOUT_RATES = (0.08, 0.09, 0.10, 0.11, 0.12)
NUM_DROPOUTS = len(DROPOUT_RATES)
NUM_RAND_WORDS = (NUM_DROPOUTS + 1) // 2  # 3 u32 draws -> 6 sixteen-bit halves

# Integer drop thresholds on 16-bit uniforms: keep iff u16 >= thresh, P(keep) = 1 - p.
_THRESH = tuple(int(round(p * 65536.0)) for p in DROPOUT_RATES)
# Keep constants with the 1/5 mean folded in: c_i = 1 / (5 * (1 - p_i)).
_KEEP_C = tuple(1.0 / (NUM_DROPOUTS * (1.0 - p)) for p in DROPOUT_RATES)


def multi_dropout_kernel(x_ref, bits_ref, w_ref, b_ref, o_ref):
    # x_ref: (TB, H); bits_ref: (W, TB, H) uint32; w_ref: (H, C); b_ref: (1, C)
    x = x_ref[...]                     # (TB, H)  (f32; bf16 input also fine, promotes)
    bits = bits_ref[...]               # (W, TB, H) uint32

    # Two independent 16-bit uniforms per u32 word.
    halves = []
    for k in range(bits.shape[0]):
        word = bits[k]
        halves.append(word & jnp.uint32(0xFFFF))
        halves.append(lax.shift_right_logical(word, jnp.uint32(16)))

    # Effective per-element weight: 1 compare + 1 select per mask, mean folded in.
    w_eff = jnp.where(halves[0] >= jnp.uint32(_THRESH[0]),
                      jnp.float32(_KEEP_C[0]), jnp.float32(0.0))
    for h, t, c in zip(halves[1:NUM_DROPOUTS], _THRESH[1:], _KEEP_C[1:]):
        w_eff = w_eff + jnp.where(h >= jnp.uint32(t),
                                  jnp.float32(c), jnp.float32(0.0))

    xm = (x * w_eff).astype(jnp.float32)       # single full-tile multiply by x
    o_ref[...] = (
        jnp.dot(xm, w_ref[...], preferred_element_type=jnp.float32) + b_ref[...]
    )


def _pick_tile_b(batch, hidden):
    # Keep double-buffered (x + random bits) tiles well under the scoped VMEM
    # default on every chip, sized for v7x's 64 MiB physical VMEM.
    budget = 8 * 1024 * 1024
    per_row = (1 + NUM_RAND_WORDS) * hidden * 4 * 2   # x + bits, double-buffered
    t = max(8, (budget // max(per_row, 1)) // 8 * 8)
    return batch if batch <= t else t


def multi_dropout(x, w_t, bias, key, *, tile_b=None):
    """x: (B, H); w_t: (H, C) pre-transposed Linear weight; bias: (C,); key: PRNG key."""
    B, H = x.shape
    C = w_t.shape[1]
    bits = jax.random.bits(key, (NUM_RAND_WORDS, B, H), dtype=jnp.uint32)
    b2 = bias.reshape(1, C).astype(jnp.float32)

    if tile_b is None:
        tile_b = _pick_tile_b(B, H)
    tile_b = min(tile_b, B)
    grid = (pl.cdiv(B, tile_b),)

    return pl.pallas_call(
        multi_dropout_kernel,
        out_shape=jax.ShapeDtypeStruct((B, C), jnp.float32),
        grid=grid,
        in_specs=[
            pl.BlockSpec((tile_b, H), lambda i: (i, 0)),                 # x tile
            pl.BlockSpec((NUM_RAND_WORDS, tile_b, H), lambda i: (0, i, 0)),  # bits tile
            pl.BlockSpec((H, C), lambda i: (0, 0)),                      # weight (resident)
            pl.BlockSpec((1, C), lambda i: (0, 0)),                      # bias (resident)
        ],
        out_specs=pl.BlockSpec((tile_b, C), lambda i: (i, 0)),
        compiler_params=pltpu.CompilerParams(
            dimension_semantics=("parallel",)),                          # 2 TCs on v7x
    )(x, bits, w_t, b2)


if __name__ == "__main__":
    # Small shapes consistent with the module: batch=8, hidden_size=32, num_classes=4
    B, H, C = 8, 32, 4

    key = jax.random.PRNGKey(0)
    kx, kw, kb, kd = jax.random.split(key, 4)

    x = jax.random.normal(kx, (B, H), dtype=jnp.float32)
    # nn.Linear(hidden_size, num_classes) parameters (PyTorch layout (C, H)).
    weight = jax.random.normal(kw, (C, H), dtype=jnp.float32) * (1.0 / jnp.sqrt(H))
    bias = jax.random.normal(kb, (C,), dtype=jnp.float32) * 0.01
    w_t = jnp.asarray(weight.T)   # transpose hoisted: done once, kernel consumes (H, C)

    out = multi_dropout(x, w_t, bias, kd)
    out = jax.block_until_ready(out)

    assert out.shape == (B, C) and out.dtype == jnp.float32
    assert bool(jnp.all(jnp.isfinite(out)))

    # Reference: faithful 5-dropout / 5-matmul / average forward using the same
    # random bits (jax.random.bits with the same key is deterministic).
    bits = jax.random.bits(kd, (NUM_RAND_WORDS, B, H), dtype=jnp.uint32)
    halves = []
    for k in range(NUM_RAND_WORDS):
        halves.append(bits[k] & jnp.uint32(0xFFFF))
        halves.append(bits[k] >> 16)
    logits_sum = jnp.zeros((B, C), jnp.float32)
    for i, p in enumerate(DROPOUT_RATES):
        keep = halves[i] >= jnp.uint32(_THRESH[i])
        xd = jnp.where(keep, x / (1.0 - p), 0.0)
        logits_sum = logits_sum + (xd @ w_t + bias)
    ref = logits_sum / NUM_DROPOUTS
    assert bool(jnp.allclose(out, ref, rtol=1e-4, atol=1e-4))

    print("KERNEL_OK")
</pallas_src>

<mosaic_0001>
module attributes {stable_mosaic.version = 11 : i64} {
  func.func @multi_dropout_kernel(%arg0: i32, %arg1: memref<8x32xf32, #tpu.memory_space<vmem>>, %arg2: memref<3x8x32xi32, #tpu.memory_space<vmem>>, %arg3: memref<32x4xf32, #tpu.memory_space<vmem>>, %arg4: memref<1x4xf32, #tpu.memory_space<vmem>>, %arg5: memref<8x4xf32, #tpu.memory_space<vmem>>) attributes {dimension_semantics = [#tpu.dimension_semantics<parallel>], iteration_bounds = array<i64: 1>, scalar_prefetch = 0 : i64, scratch_operands = 0 : i64, tpu.core_type = #tpu.core_type<tc>, window_params = [{transform_indices = @transform_0, window_bounds = array<i64: 8, 32>}, {transform_indices = @transform_1, window_bounds = array<i64: 3, 8, 32>}, {pipeline_mode = #tpu.pipeline_mode<synchronous>, transform_indices = @transform_2, window_bounds = array<i64: 32, 4>}, {pipeline_mode = #tpu.pipeline_mode<synchronous>, transform_indices = @transform_3, window_bounds = array<i64: 1, 4>}, {transform_indices = @transform_4, window_bounds = array<i64: 8, 4>}]} {
    %c0 = arith.constant 0 : index
    %c0_0 = arith.constant 0 : index
    %0 = vector.load %arg1[%c0, %c0_0] : memref<8x32xf32, #tpu.memory_space<vmem>>, vector<8x32xf32>
    %c0_1 = arith.constant 0 : index
    %c0_2 = arith.constant 0 : index
    %c0_3 = arith.constant 0 : index
    %1 = vector.load %arg2[%c0_1, %c0_2, %c0_3] : memref<3x8x32xi32, #tpu.memory_space<vmem>>, vector<3x8x32xi32>
    %2 = vector.extract_strided_slice %1 {offsets = [0, 0, 0], sizes = [1, 8, 32], strides = [1, 1, 1]} : vector<3x8x32xi32> to vector<1x8x32xi32>
    %3 = vector.shape_cast %2 : vector<1x8x32xi32> to vector<8x32xi32>
    %c65535_i32 = arith.constant 65535 : i32
    %4 = vector.broadcast %c65535_i32 : i32 to vector<8x32xi32>
    %5 = arith.andi %3, %4 : vector<8x32xi32>
    %c16_i32 = arith.constant 16 : i32
    %6 = vector.broadcast %c16_i32 : i32 to vector<8x32xi32>
    %7 = arith.shrui %3, %6 : vector<8x32xi32>
    %8 = vector.extract_strided_slice %1 {offsets = [1, 0, 0], sizes = [1, 8, 32], strides = [1, 1, 1]} : vector<3x8x32xi32> to vector<1x8x32xi32>
    %9 = vector.shape_cast %8 : vector<1x8x32xi32> to vector<8x32xi32>
    %c65535_i32_4 = arith.constant 65535 : i32
    %10 = vector.broadcast %c65535_i32_4 : i32 to vector<8x32xi32>
    %11 = arith.andi %9, %10 : vector<8x32xi32>
    %c16_i32_5 = arith.constant 16 : i32
    %12 = vector.broadcast %c16_i32_5 : i32 to vector<8x32xi32>
    %13 = arith.shrui %9, %12 : vector<8x32xi32>
    %14 = vector.extract_strided_slice %1 {offsets = [2, 0, 0], sizes = [1, 8, 32], strides = [1, 1, 1]} : vector<3x8x32xi32> to vector<1x8x32xi32>
    %15 = vector.shape_cast %14 : vector<1x8x32xi32> to vector<8x32xi32>
    %c65535_i32_6 = arith.constant 65535 : i32
    %16 = vector.broadcast %c65535_i32_6 : i32 to vector<8x32xi32>
    %17 = arith.andi %15, %16 : vector<8x32xi32>
    %c5243_i32 = arith.constant 5243 : i32
    %18 = vector.broadcast %c5243_i32 : i32 to vector<8x32xi32>
    %19 = arith.cmpi uge, %5, %18 : vector<8x32xi32>
    %cst = arith.constant 0.217391297 : f32
    %cst_7 = arith.constant 0.000000e+00 : f32
    %20 = vector.broadcast %cst : f32 to vector<8x32xf32>
    %21 = vector.broadcast %cst_7 : f32 to vector<8x32xf32>
    %22 = arith.select %19, %20, %21 : vector<8x32xi1>, vector<8x32xf32>
    %c5898_i32 = arith.constant 5898 : i32
    %23 = vector.broadcast %c5898_i32 : i32 to vector<8x32xi32>
    %24 = arith.cmpi uge, %7, %23 : vector<8x32xi32>
    %cst_8 = arith.constant 0.219780222 : f32
    %cst_9 = arith.constant 0.000000e+00 : f32
    %25 = vector.broadcast %cst_8 : f32 to vector<8x32xf32>
    %26 = vector.broadcast %cst_9 : f32 to vector<8x32xf32>
    %27 = arith.select %24, %25, %26 : vector<8x32xi1>, vector<8x32xf32>
    %28 = arith.addf %22, %27 : vector<8x32xf32>
    %c6554_i32 = arith.constant 6554 : i32
    %29 = vector.broadcast %c6554_i32 : i32 to vector<8x32xi32>
    %30 = arith.cmpi uge, %11, %29 : vector<8x32xi32>
    %cst_10 = arith.constant 0.222222224 : f32
    %cst_11 = arith.constant 0.000000e+00 : f32
    %31 = vector.broadcast %cst_10 : f32 to vector<8x32xf32>
    %32 = vector.broadcast %cst_11 : f32 to vector<8x32xf32>
    %33 = arith.select %30, %31, %32 : vector<8x32xi1>, vector<8x32xf32>
    %34 = arith.addf %28, %33 : vector<8x32xf32>
    %c7209_i32 = arith.constant 7209 : i32
    %35 = vector.broadcast %c7209_i32 : i32 to vector<8x32xi32>
    %36 = arith.cmpi uge, %13, %35 : vector<8x32xi32>
    %cst_12 = arith.constant 0.224719107 : f32
    %cst_13 = arith.constant 0.000000e+00 : f32
    %37 = vector.broadcast %cst_12 : f32 to vector<8x32xf32>
    %38 = vector.broadcast %cst_13 : f32 to vector<8x32xf32>
    %39 = arith.select %36, %37, %38 : vector<8x32xi1>, vector<8x32xf32>
    %40 = arith.addf %34, %39 : vector<8x32xf32>
    %c7864_i32 = arith.constant 7864 : i32
    %41 = vector.broadcast %c7864_i32 : i32 to vector<8x32xi32>
    %42 = arith.cmpi uge, %17, %41 : vector<8x32xi32>
    %cst_14 = arith.constant 0.227272734 : f32
    %cst_15 = arith.constant 0.000000e+00 : f32
    %43 = vector.broadcast %cst_14 : f32 to vector<8x32xf32>
    %44 = vector.broadcast %cst_15 : f32 to vector<8x32xf32>
    %45 = arith.select %42, %43, %44 : vector<8x32xi1>, vector<8x32xf32>
    %46 = arith.addf %40, %45 : vector<8x32xf32>
    %47 = arith.mulf %0, %46 : vector<8x32xf32>
    %c0_16 = arith.constant 0 : index
    %c0_17 = arith.constant 0 : index
    %48 = vector.load %arg3[%c0_16, %c0_17] : memref<32x4xf32, #tpu.memory_space<vmem>>, vector<32x4xf32>
    %cst_18 = arith.constant dense<0.000000e+00> : vector<8x4xf32>
    %49 = tpu.matmul %47, %48, %cst_18 {dimension_numbers = #tpu.dot_dimension_numbers<[1], [0], [0], [1], [0, 0, 1, 1], [], []>} : vector<8x32xf32>, vector<32x4xf32>, vector<8x4xf32> -> vector<8x4xf32>
    %c0_19 = arith.constant 0 : index
    %c0_20 = arith.constant 0 : index
    %50 = vector.load %arg4[%c0_19, %c0_20] : memref<1x4xf32, #tpu.memory_space<vmem>>, vector<1x4xf32>
    %51 = vector.broadcast %50 : vector<1x4xf32> to vector<8x4xf32>
    %52 = arith.addf %49, %51 : vector<8x4xf32>
    %c0_21 = arith.constant 0 : index
    %c0_22 = arith.constant 0 : index
    %53 = vector.load %arg5[%c0_21, %c0_22] : memref<8x4xf32, #tpu.memory_space<vmem>>, vector<8x4xf32>
    tpu.vector_store %arg5[%c0_21, %c0_22], %52 {strides = array<i32>} : memref<8x4xf32, #tpu.memory_space<vmem>>, vector<8x4xf32>,
    return
  }
  func.func @transform_0(%arg0: i32) -> (i32, i32) {
    %c0_i32 = arith.constant 0 : i32
    %c0_i32_0 = arith.constant 0 : i32
    return %arg0, %c0_i32 : i32, i32
  }
  func.func @transform_1(%arg0: i32) -> (i32, i32, i32) {
    %c0_i32 = arith.constant 0 : i32
    %c0_i32_0 = arith.constant 0 : i32
    %c0_i32_1 = arith.constant 0 : i32
    return %c0_i32, %arg0, %c0_i32_0 : i32, i32, i32
  }
  func.func @transform_2(%arg0: i32) -> (i32, i32) {
    %c0_i32 = arith.constant 0 : i32
    %c0_i32_0 = arith.constant 0 : i32
    %c0_i32_1 = arith.constant 0 : i32
    return %c0_i32, %c0_i32_0 : i32, i32
  }
  func.func @transform_3(%arg0: i32) -> (i32, i32) {
    %c0_i32 = arith.constant 0 : i32
    %c0_i32_0 = arith.constant 0 : i32
    %c0_i32_1 = arith.constant 0 : i32
    return %c0_i32, %c0_i32_0 : i32, i32
  }
  func.func @transform_4(%arg0: i32) -> (i32, i32) {
    %c0_i32 = arith.constant 0 : i32
    %c0_i32_0 = arith.constant 0 : i32
    return %arg0, %c0_i32 : i32, i32
  }
}

</mosaic_0001>

<llo_original>
// kernel: tpu_custom_call.1
$region0: #{tpu_custom_call.1}
  #allocation0 [shape = 'u32[]', space=smem, size = 0x4, offset = 0x4, fixed_abs, tag = 'smem constant byte address 0x4 - core index']
  #allocation1 [shape = 'u32[72,128]{1,0:T(1,128)}', space=vmem, size = 0x9000, scoped, tag = 'internal scratch']
  %s0 = inlined_call_operand.vmem [shape: f32[8,32], index: 0, kind: input, shape index: {}]
  %s1 = inlined_call_operand.vmem [shape: u32[3,8,32], index: 1, kind: input, shape index: {}]
  %s2 = inlined_call_operand.vmem [shape: f32[32,4], index: 2, kind: input, shape index: {}]
  %s3 = inlined_call_operand.vmem [shape: f32[1,4], index: 3, kind: input, shape index: {}]
  %s4 = inlined_call_operand.vmem [shape: f32[8,4], index: 4, kind: output, shape index: {}]
  %s5 = sld [smem:[#allocation0]]
  $region26: #{tpu_custom_call.1} parent=0
    _
  %s7 = ssub.s32 1, %s5
  %s8 = scalar_select 0, %s7, %s5
  // Predicated region
  $region2: #{tpu_custom_call.1} parent=0 // pred_check
    _
  $region3: #{tpu_custom_call.1} parent=0 // pred_check_branch
    %10 = sbr.rel (0) target = $region5
  $region4: #{tpu_custom_call.1} parent=0 // pred_region
    _
  $region5: #{tpu_custom_call.1} parent=0 // pred_fallthru
    _
  // Predicated region
  $region6: #{tpu_custom_call.1} parent=0 // pred_check
    _
  $region7: #{tpu_custom_call.1} parent=0 // pred_check_branch
    %12 = sbr.rel (0) target = $region9
  $region8: #{tpu_custom_call.1} parent=0 // pred_region
    _
  $region9: #{tpu_custom_call.1} parent=0 // pred_fallthru
    _
  // Predicated region
  $region10: #{tpu_custom_call.1} parent=0 // pred_check
    _
  $region11: #{tpu_custom_call.1} parent=0 // pred_check_branch
    %14 = sbr.rel (0) target = $region13
  $region12: #{tpu_custom_call.1} parent=0 // pred_region
    _
  $region13: #{tpu_custom_call.1} parent=0 // pred_fallthru
    _
  // Predicated region
  $region14: #{tpu_custom_call.1} parent=0 // pred_check
    _
  $region15: #{tpu_custom_call.1} parent=0 // pred_check_branch
    %16 = sbr.rel (0) target = $region17
  $region16: #{tpu_custom_call.1} parent=0 // pred_region
    _
  $region17: #{tpu_custom_call.1} parent=0 // pred_fallthru
    _
  %v17 = vld [vmem:[%s0] sm:$0xff]
  %v18 = vld [vmem:[%s1] sm:$0xff]
  %v19 = vld [vmem:[%s1 + $0x8] sm:$0xff]
  %v20 = vld [vmem:[%s1 + $0x10] sm:$0xff]
  %v21 = vand.u32 %v18, 65535
  %v22 = vshrl.u32 %v18, 16
  %v23 = vand.u32 %v19, 65535
  %v24 = vshrl.u32 %v19, 16
  %v25 = vand.u32 %v20, 65535
  %v26 = vadd.s32 %v21, 2147483648
  %vm28 = vcmp.ge.s32.totalorder %v26, 2147488891
  %v29 = vsel %vm28, 0.2173913, 0.0
  %v30 = vadd.s32 %v22, 2147483648
  %vm32 = vcmp.ge.s32.totalorder %v30, 2147489546
  %v33 = vsel %vm32, 0.21978022, 0.0
  %v34 = vadd.f32 %v29, %v33
  %v35 = vadd.s32 %v23, 2147483648
  %vm37 = vcmp.ge.s32.totalorder %v35, 2147490202
  %v38 = vsel %vm37, 0.22222222, 0.0
  %v39 = vadd.f32 %v34, %v38
  %v40 = vadd.s32 %v24, 2147483648
  %vm42 = vcmp.ge.s32.totalorder %v40, 2147490857
  %v43 = vsel %vm42, 0.2247191, 0.0
  %v44 = vadd.f32 %v39, %v43
  %v45 = vadd.s32 %v25, 2147483648
  %vm47 = vcmp.ge.s32.totalorder %v45, 2147491512
  %v48 = vsel %vm47, 0.22727273, 0.0
  %v49 = vadd.f32 %v44, %v48
  %v50 = vmul.f32 %v17, %v49
  %v51 = vld [vmem:[%s2] sm:$0xff]
  %v52 = vld [vmem:[%s2 + $0x8] sm:$0xff]
  %v53 = vld [vmem:[%s2 + $0x10] sm:$0xff]
  %v54 = vld [vmem:[%s2 + $0x18] sm:$0xff]
  %v55 = vld [vmem:[%s3] sm:$0x1]
  %v57 = vperm.slane %v55, 0
  %vm59 = vcmask 261120
  %v61 = vsel %vm59, %v50, 0
  %63 = vmatpush.msra.mxu0 0.0
  %64 = vmatpush.msra.mxu0 0.0
  %65 = vmatpush.msra.mxu0 0.0
  %66 = vmatpush.msra.mxu0 0.0
  %67 = vmatpush.msra.mxu0 0.0
  %68 = vmatpush.msra.mxu0 0.0
  %69 = vmatpush.msra.mxu0 0.0
  %70 = vmatpush.msra.mxu0 0.0
  %71 = vmatpush.msra.mxu0 0.0
  %72 = vmatpush.msra.mxu0 0.0
  %73 = vmatpush.msra.mxu0 0.0
  %74 = vmatpush.msra.mxu0 0.0
  %75 = vmatpush.msra.mxu0 %v54
  %76 = vmatpush.msra.mxu0 %v53
  %77 = vmatpush.msra.mxu0 %v52
  %78 = vmatpush.msra.mxu0 %v51
  %79 = vmatmul.f32.gmra.mxu0 %v61
  %v80 = vpop.f32.mrf.mxu0
  %v81 = vadd.f32 %v57, %v80
  %82 = vdwg.mxu0
  %vm83 = vcmask 31744
  %84 = vst.msk [vmem:[%s4] sm:$0xff] %vm83, %v81
  // Predicated region
  $region18: #{tpu_custom_call.1} parent=0 // pred_check
    _
  $region19: #{tpu_custom_call.1} parent=0 // pred_check_branch
    %86 = sbr.rel (0) target = $region21
  $region20: #{tpu_custom_call.1} parent=0 // pred_region
    _
  $region21: #{tpu_custom_call.1} parent=0 // pred_fallthru
    _
  // Predicated region
  $region22: #{tpu_custom_call.1} parent=0 // pred_check
    _
  $region23: #{tpu_custom_call.1} parent=0 // pred_check_branch
    %88 = sbr.rel (0) target = $region25
  $region24: #{tpu_custom_call.1} parent=0 // pred_region
    _
  $region25: #{tpu_custom_call.1} parent=0 // pred_fallthru
    _

</llo_original>
